<compile_context>
chip_gen: v7x
topology: tpu7x:2x2x1
jax: 0.10.0
libtpu: 0.0.40
codegen_flags: <defaults>
</compile_context>

<pallas_src>
import functools

import jax
import jax.numpy as jnp
from jax.experimental import pallas as pl
from jax.experimental.pallas import tpu as pltpu


def _feature_extractor_kernel(p_ref, wt_ref, gamma_ref, beta_ref,
                              wf_ref, bf_ref, out_ref, *, eps):
    """One batch-block per grid step.

    p_ref:     (Bblk, 9*Cin, H*W)  bf16  im2col patches (K-major, spatial in lanes)
    wt_ref:    (Cout, 9*Cin)       bf16  conv weight, transposed
    gamma_ref: (1, Cout, 1)        f32   instance-norm scale
    beta_ref:  (1, Cout, 1)        f32   instance-norm shift
    wf_ref:    (Cout, out_params)  bf16  linear head weight
    bf_ref:    (1, out_params)     f32   linear head bias
    out_ref:   (Bblk, out_params)  f32
    """
    p = p_ref[...]                                   # (Bblk, K, HW) bf16
    wt = wt_ref[...]                                 # (Cout, K)     bf16
    bblk = p.shape[0]

    # Conv (im2col) as one lane-dense batched MXU matmul, f32 accumulation.
    # Output layout (Bblk, Cout, HW): spatial axis (256) occupies the lanes.
    wt_b = jnp.broadcast_to(wt[None], (bblk,) + wt.shape)
    acc = jnp.einsum('bck,bkn->bcn', wt_b, p,
                     preferred_element_type=jnp.float32)   # (Bblk, Cout, HW) f32

    # Instance norm (biased var, one-pass stats). Conv bias omitted: a
    # per-channel constant is exactly cancelled by the mean subtraction here.
    mean = jnp.mean(acc, axis=-1, keepdims=True)                    # (Bblk,Cout,1)
    var = jnp.mean(acc * acc, axis=-1, keepdims=True) - mean * mean
    scale = gamma_ref[...] * jax.lax.rsqrt(var + eps)               # (Bblk,Cout,1)
    shift = beta_ref[...] - mean * scale
    y = jnp.maximum(acc * scale + shift, 0.0)                       # ReLU

    # Dropout(p_dropout): identity at inference time (PyTorch eval() semantics).

    # Global average pool over spatial positions (lane/XLU reduction).
    pooled = jnp.mean(y, axis=-1)                                   # (Bblk, Cout)

    # Batched linear head on the MXU.
    feat = jnp.dot(pooled.astype(wf_ref.dtype), wf_ref[...],
                   preferred_element_type=jnp.float32) + bf_ref[...]

    out_ref[...] = feat.astype(out_ref.dtype)


def feature_extractor_forward(x_nchw, params, *, eps=1e-5, batch_block=None):
    """x_nchw: (N, Cin, H, W) float32 (PyTorch layout). Returns (N, out_params)."""
    wc = params["conv_w"]          # (3, 3, Cin, Cout)
    gamma = params["gamma"]        # (Cout,)
    beta = params["beta"]          # (Cout,)
    wf = params["fc_w"]            # (Cout, out_params)
    bf = params["fc_b"]            # (out_params,)

    N, Cin, H, W = x_nchw.shape
    Cout = wc.shape[-1]
    P = wf.shape[-1]
    K = 9 * Cin
    HW = H * W

    bblk = N if batch_block is None else batch_block
    assert N % bblk == 0, "batch must be divisible by the batch block"
    assert bblk == N or bblk % 8 == 0, "batch block must equal N or be a multiple of 8"

    # ---- wrapper-side layout plumbing (free for XLA) ------------------------
    # NCHW -> NHWC, zero-pad for the "same" 3x3 conv, im2col to (N, K, H*W)
    # with the spatial axis last (lane-dense inside the kernel), bf16 operands.
    x = jnp.transpose(x_nchw, (0, 2, 3, 1))                    # (N, H, W, Cin)
    xp = jnp.pad(x, ((0, 0), (1, 1), (1, 1), (0, 0)))          # (N, H+2, W+2, Cin)
    taps = [xp[:, kh:kh + H, kw:kw + W, :]
            for kh in range(3) for kw in range(3)]
    patches = jnp.stack(taps, axis=3).reshape(N, HW, K)        # K order: (tap, cin)
    patches_t = jnp.transpose(patches, (0, 2, 1)).astype(jnp.bfloat16)   # (N, K, HW)

    wt = jnp.transpose(wc.reshape(K, Cout)).astype(jnp.bfloat16)         # (Cout, K)
    gamma3 = gamma.reshape(1, Cout, 1).astype(jnp.float32)
    beta3 = beta.reshape(1, Cout, 1).astype(jnp.float32)
    wf16 = wf.astype(jnp.bfloat16)
    bf2 = bf.reshape(1, P).astype(jnp.float32)

    kernel = functools.partial(_feature_extractor_kernel, eps=eps)

    return pl.pallas_call(
        kernel,
        out_shape=jax.ShapeDtypeStruct((N, P), jnp.float32),
        grid_spec=pltpu.PrefetchScalarGridSpec(
            num_scalar_prefetch=0,
            grid=(N // bblk,),
            in_specs=[
                pl.BlockSpec((bblk, K, HW), lambda b: (b, 0, 0)),   # patches
                pl.BlockSpec((Cout, K), lambda b: (0, 0)),          # conv weight^T
                pl.BlockSpec((1, Cout, 1), lambda b: (0, 0, 0)),    # gamma
                pl.BlockSpec((1, Cout, 1), lambda b: (0, 0, 0)),    # beta
                pl.BlockSpec((Cout, P), lambda b: (0, 0)),          # fc weight
                pl.BlockSpec((1, P), lambda b: (0, 0)),             # fc bias
            ],
            out_specs=pl.BlockSpec((bblk, P), lambda b: (b, 0)),
        ),
        compiler_params=pltpu.CompilerParams(
            dimension_semantics=("parallel",)),
    )(patches_t, wt, gamma3, beta3, wf16, bf2)


def init_params(key, in_channels, hidden, out_params):
    k = jax.random.split(key, 3)
    conv_w = 0.1 * jax.random.normal(k[0], (3, 3, in_channels, hidden), jnp.float32)
    # NOTE: no conv bias — a per-channel bias before instance norm is a no-op.
    gamma = jnp.ones((hidden,), jnp.float32)
    beta = jnp.zeros((hidden,), jnp.float32)
    fc_w = 0.1 * jax.random.normal(k[1], (hidden, out_params), jnp.float32)
    fc_b = 0.01 * jax.random.normal(k[2], (out_params,), jnp.float32)
    return dict(conv_w=conv_w, gamma=gamma, beta=beta, fc_w=fc_w, fc_b=fc_b)


def reference_forward(x_nchw, params, eps=1e-5):
    """Pure-JAX (XLA) reference of the same forward pass, f32 throughout."""
    wc, gamma, beta, wf, bf = (params[k] for k in
                               ("conv_w", "gamma", "beta", "fc_w", "fc_b"))
    x = jnp.transpose(x_nchw, (0, 2, 3, 1))                            # NHWC
    y = jax.lax.conv_general_dilated(
        x, wc, window_strides=(1, 1), padding="SAME",
        dimension_numbers=("NHWC", "HWIO", "NHWC"))
    mean = jnp.mean(y, axis=(1, 2), keepdims=True)
    var = jnp.var(y, axis=(1, 2), keepdims=True)                       # biased
    y = (y - mean) * jax.lax.rsqrt(var + eps)
    y = y * gamma.reshape(1, 1, 1, -1) + beta.reshape(1, 1, 1, -1)
    y = jnp.maximum(y, 0.0)
    pooled = jnp.mean(y, axis=(1, 2))                                  # (N, Cout)
    return pooled @ wf + bf.reshape(1, -1)


if __name__ == "__main__":
    key = jax.random.PRNGKey(0)
    kx, kp = jax.random.split(key)

    N, Cin, H, W = 2, 4, 16, 16     # small shapes consistent with the module
    HIDDEN, OUT_PARAMS = 32, 8
    P_DROPOUT = 0.0                  # dropout is identity at inference anyway

    x = jax.random.normal(kx, (N, Cin, H, W), jnp.float32)
    params = init_params(kp, Cin, HIDDEN, OUT_PARAMS)

    fwd = jax.jit(feature_extractor_forward)
    out = fwd(x, params)
    jax.block_until_ready(out)

    assert out.shape == (N, OUT_PARAMS) and out.dtype == jnp.float32

    # Loose tolerance: kernel uses bf16 MXU operands with f32 accumulation.
    ref = reference_forward(x, params)
    assert bool(jnp.allclose(out, ref, atol=0.1, rtol=0.1)), (out, ref)

    print("KERNEL_OK")
</pallas_src>

<mosaic_0001>
module attributes {stable_mosaic.version = 11 : i64} {
  func.func @_feature_extractor_kernel(%arg0: i32, %arg1: memref<2x36x256xbf16, #tpu.memory_space<vmem>>, %arg2: memref<32x36xbf16, #tpu.memory_space<vmem>>, %arg3: memref<1x32x1xf32, #tpu.memory_space<vmem>>, %arg4: memref<1x32x1xf32, #tpu.memory_space<vmem>>, %arg5: memref<32x8xbf16, #tpu.memory_space<vmem>>, %arg6: memref<1x8xf32, #tpu.memory_space<vmem>>, %arg7: memref<2x8xf32, #tpu.memory_space<vmem>>) attributes {dimension_semantics = [#tpu.dimension_semantics<parallel>], iteration_bounds = array<i64: 1>, scalar_prefetch = 0 : i64, scratch_operands = 0 : i64, tpu.core_type = #tpu.core_type<tc>, window_params = [{transform_indices = @transform_0, window_bounds = array<i64: 2, 36, 256>}, {pipeline_mode = #tpu.pipeline_mode<synchronous>, transform_indices = @transform_1, window_bounds = array<i64: 32, 36>}, {pipeline_mode = #tpu.pipeline_mode<synchronous>, transform_indices = @transform_2, window_bounds = array<i64: 1, 32, 1>}, {pipeline_mode = #tpu.pipeline_mode<synchronous>, transform_indices = @transform_3, window_bounds = array<i64: 1, 32, 1>}, {pipeline_mode = #tpu.pipeline_mode<synchronous>, transform_indices = @transform_4, window_bounds = array<i64: 32, 8>}, {pipeline_mode = #tpu.pipeline_mode<synchronous>, transform_indices = @transform_5, window_bounds = array<i64: 1, 8>}, {transform_indices = @transform_6, window_bounds = array<i64: 2, 8>}]} {
    %c0 = arith.constant 0 : index
    %c0_0 = arith.constant 0 : index
    %c0_1 = arith.constant 0 : index
    %0 = vector.load %arg1[%c0, %c0_0, %c0_1] : memref<2x36x256xbf16, #tpu.memory_space<vmem>>, vector<2x36x256xbf16>
    %c0_2 = arith.constant 0 : index
    %c0_3 = arith.constant 0 : index
    %1 = vector.load %arg2[%c0_2, %c0_3] : memref<32x36xbf16, #tpu.memory_space<vmem>>, vector<32x36xbf16>
    %2 = vector.shape_cast %1 : vector<32x36xbf16> to vector<1x32x36xbf16>
    %3 = vector.shape_cast %2 : vector<1x32x36xbf16> to vector<1x32x36xbf16>
    %4 = vector.broadcast %3 : vector<1x32x36xbf16> to vector<2x32x36xbf16>
    "tpu.trace_start"() <{level = 10 : i32, message = "bck,bkn->bcn"}> : () -> ()
    %cst = arith.constant dense<0.000000e+00> : vector<2x32x256xf32>
    %5 = tpu.matmul %4, %0, %cst {dimension_numbers = #tpu.dot_dimension_numbers<[2], [1], [1], [2], [0, 0, 0, 1, 1, 2], [0], [0]>} : vector<2x32x36xbf16>, vector<2x36x256xbf16>, vector<2x32x256xf32> -> vector<2x32x256xf32>
    "tpu.trace_stop"() : () -> ()
    %cst_4 = arith.constant dense<0.000000e+00> : vector<2x32xf32>
    %6 = vector.multi_reduction <add>, %5, %cst_4 [2] : vector<2x32x256xf32> to vector<2x32xf32>
    %7 = vector.shape_cast %6 : vector<2x32xf32> to vector<2x32x1xf32>
    %cst_5 = arith.constant 2.560000e+02 : f32
    %8 = vector.broadcast %cst_5 : f32 to vector<2x32x1xf32>
    %9 = arith.divf %7, %8 : vector<2x32x1xf32>
    %10 = arith.mulf %5, %5 : vector<2x32x256xf32>
    %cst_6 = arith.constant dense<0.000000e+00> : vector<2x32xf32>
    %11 = vector.multi_reduction <add>, %10, %cst_6 [2] : vector<2x32x256xf32> to vector<2x32xf32>
    %12 = vector.shape_cast %11 : vector<2x32xf32> to vector<2x32x1xf32>
    %cst_7 = arith.constant 2.560000e+02 : f32
    %13 = vector.broadcast %cst_7 : f32 to vector<2x32x1xf32>
    %14 = arith.divf %12, %13 : vector<2x32x1xf32>
    %15 = arith.mulf %9, %9 : vector<2x32x1xf32>
    %16 = arith.subf %14, %15 : vector<2x32x1xf32>
    %c0_8 = arith.constant 0 : index
    %c0_9 = arith.constant 0 : index
    %c0_10 = arith.constant 0 : index
    %17 = vector.load %arg3[%c0_8, %c0_9, %c0_10] : memref<1x32x1xf32, #tpu.memory_space<vmem>>, vector<1x32x1xf32>
    %cst_11 = arith.constant 9.99999974E-6 : f32
    %18 = vector.broadcast %cst_11 : f32 to vector<2x32x1xf32>
    %19 = arith.addf %16, %18 : vector<2x32x1xf32>
    %20 = math.rsqrt %19 : vector<2x32x1xf32>
    %21 = vector.broadcast %17 : vector<1x32x1xf32> to vector<2x32x1xf32>
    %22 = arith.mulf %21, %20 : vector<2x32x1xf32>
    %c0_12 = arith.constant 0 : index
    %c0_13 = arith.constant 0 : index
    %c0_14 = arith.constant 0 : index
    %23 = vector.load %arg4[%c0_12, %c0_13, %c0_14] : memref<1x32x1xf32, #tpu.memory_space<vmem>>, vector<1x32x1xf32>
    %24 = arith.mulf %9, %22 : vector<2x32x1xf32>
    %25 = vector.broadcast %23 : vector<1x32x1xf32> to vector<2x32x1xf32>
    %26 = arith.subf %25, %24 : vector<2x32x1xf32>
    %27 = vector.broadcast %22 : vector<2x32x1xf32> to vector<2x32x256xf32>
    %28 = arith.mulf %5, %27 : vector<2x32x256xf32>
    %29 = vector.broadcast %26 : vector<2x32x1xf32> to vector<2x32x256xf32>
    %30 = arith.addf %28, %29 : vector<2x32x256xf32>
    %cst_15 = arith.constant 0.000000e+00 : f32
    %31 = vector.broadcast %cst_15 : f32 to vector<2x32x256xf32>
    %32 = arith.maximumf %30, %31 : vector<2x32x256xf32>
    %cst_16 = arith.constant dense<0.000000e+00> : vector<2x32xf32>
    %33 = vector.multi_reduction <add>, %32, %cst_16 [2] : vector<2x32x256xf32> to vector<2x32xf32>
    %cst_17 = arith.constant 2.560000e+02 : f32
    %34 = vector.broadcast %cst_17 : f32 to vector<2x32xf32>
    %35 = arith.divf %33, %34 : vector<2x32xf32>
    %36 = arith.truncf %35 : vector<2x32xf32> to vector<2x32xbf16>
    %c0_18 = arith.constant 0 : index
    %c0_19 = arith.constant 0 : index
    %37 = vector.load %arg5[%c0_18, %c0_19] : memref<32x8xbf16, #tpu.memory_space<vmem>>, vector<32x8xbf16>
    %cst_20 = arith.constant dense<0.000000e+00> : vector<2x8xf32>
    %38 = tpu.matmul %36, %37, %cst_20 {dimension_numbers = #tpu.dot_dimension_numbers<[1], [0], [0], [1], [0, 0, 1, 1], [], []>} : vector<2x32xbf16>, vector<32x8xbf16>, vector<2x8xf32> -> vector<2x8xf32>
    %c0_21 = arith.constant 0 : index
    %c0_22 = arith.constant 0 : index
    %39 = vector.load %arg6[%c0_21, %c0_22] : memref<1x8xf32, #tpu.memory_space<vmem>>, vector<1x8xf32>
    %40 = vector.broadcast %39 : vector<1x8xf32> to vector<2x8xf32>
    %41 = arith.addf %38, %40 : vector<2x8xf32>
    %c0_23 = arith.constant 0 : index
    %c0_24 = arith.constant 0 : index
    %42 = vector.load %arg7[%c0_23, %c0_24] : memref<2x8xf32, #tpu.memory_space<vmem>>, vector<2x8xf32>
    tpu.vector_store %arg7[%c0_23, %c0_24], %41 {strides = array<i32>} : memref<2x8xf32, #tpu.memory_space<vmem>>, vector<2x8xf32>,
    return
  }
  func.func @transform_0(%arg0: i32) -> (i32, i32, i32) {
    %c0_i32 = arith.constant 0 : i32
    %c0_i32_0 = arith.constant 0 : i32
    %c0_i32_1 = arith.constant 0 : i32
    return %arg0, %c0_i32, %c0_i32_0 : i32, i32, i32
  }
  func.func @transform_1(%arg0: i32) -> (i32, i32) {
    %c0_i32 = arith.constant 0 : i32
    %c0_i32_0 = arith.constant 0 : i32
    %c0_i32_1 = arith.constant 0 : i32
    return %c0_i32, %c0_i32_0 : i32, i32
  }
  func.func @transform_2(%arg0: i32) -> (i32, i32, i32) {
    %c0_i32 = arith.constant 0 : i32
    %c0_i32_0 = arith.constant 0 : i32
    %c0_i32_1 = arith.constant 0 : i32
    %c0_i32_2 = arith.constant 0 : i32
    return %c0_i32, %c0_i32_0, %c0_i32_1 : i32, i32, i32
  }
  func.func @transform_3(%arg0: i32) -> (i32, i32, i32) {
    %c0_i32 = arith.constant 0 : i32
    %c0_i32_0 = arith.constant 0 : i32
    %c0_i32_1 = arith.constant 0 : i32
    %c0_i32_2 = arith.constant 0 : i32
    return %c0_i32, %c0_i32_0, %c0_i32_1 : i32, i32, i32
  }
  func.func @transform_4(%arg0: i32) -> (i32, i32) {
    %c0_i32 = arith.constant 0 : i32
    %c0_i32_0 = arith.constant 0 : i32
    %c0_i32_1 = arith.constant 0 : i32
    return %c0_i32, %c0_i32_0 : i32, i32
  }
  func.func @transform_5(%arg0: i32) -> (i32, i32) {
    %c0_i32 = arith.constant 0 : i32
    %c0_i32_0 = arith.constant 0 : i32
    %c0_i32_1 = arith.constant 0 : i32
    return %c0_i32, %c0_i32_0 : i32, i32
  }
  func.func @transform_6(%arg0: i32) -> (i32, i32) {
    %c0_i32 = arith.constant 0 : i32
    %c0_i32_0 = arith.constant 0 : i32
    return %arg0, %c0_i32 : i32, i32
  }
}

</mosaic_0001>

<llo_original>
// kernel: feature_extractor_forward.1
$region0: #{feature_extractor_forward.1}
  #allocation0 [shape = 'u32[]', space=smem, size = 0x4, offset = 0x4, fixed_abs, tag = 'smem constant byte address 0x4 - core index']
  #allocation1 [shape = 'u32[144,128]{1,0:T(1,128)}', space=vmem, size = 0x12000, scoped, tag = 'internal scratch']
  %s0 = inlined_call_operand.vmem [shape: bf16[2,36,256], index: 0, kind: input, shape index: {}]
  %s1 = inlined_call_operand.vmem [shape: bf16[32,36], index: 1, kind: input, shape index: {}]
  %s2 = inlined_call_operand.vmem [shape: f32[1,32,1], index: 2, kind: input, shape index: {}]
  %s3 = inlined_call_operand.vmem [shape: f32[1,32,1], index: 3, kind: input, shape index: {}]
  %s4 = inlined_call_operand.vmem [shape: bf16[32,8], index: 4, kind: input, shape index: {}]
  %s5 = inlined_call_operand.vmem [shape: f32[1,8], index: 5, kind: input, shape index: {}]
  %s6 = inlined_call_operand.hbm [shape: f32[2,8], index: 6, kind: output, shape index: {}]
  %s7 = sld [smem:[#allocation0]]
  $region34: #{feature_extractor_forward.1} parent=0
    _
  %s9 = ssub.s32 1, %s7
  %s10 = scalar_select 0, %s9, %s7
  $region1: #{feature_extractor_forward.1} parent=0
    #allocation2 [shape = 'u8[1024]{0}', space=vmem, size = 0x400, scoped, tag = 'output window, operand 0, single buffered']
    #allocation3 [shape = 's32[1]{0}', space=sflag, size = 0x4, scoped, tag = 'scoped memory for feature_extractor_forward.1']
    %11 = vsyncpa [#allocation3], 0
    // Predicated region
    $region2: #{feature_extractor_forward.1} parent=1 // pred_check
      _
    $region3: #{feature_extractor_forward.1} parent=1 // pred_check_branch
      %13 = sbr.rel (0) target = $region5
    $region4: #{feature_extractor_forward.1} parent=1 // pred_region
      _
    $region5: #{feature_extractor_forward.1} parent=1 // pred_fallthru
      _
    // Predicated region
    $region6: #{feature_extractor_forward.1} parent=1 // pred_check
      _
    $region7: #{feature_extractor_forward.1} parent=1 // pred_check_branch
      %15 = sbr.rel (0) target = $region9
    $region8: #{feature_extractor_forward.1} parent=1 // pred_region
      _
    $region9: #{feature_extractor_forward.1} parent=1 // pred_fallthru
      _
    // Predicated region
    $region10: #{feature_extractor_forward.1} parent=1 // pred_check
      _
    $region11: #{feature_extractor_forward.1} parent=1 // pred_check_branch
      %17 = sbr.rel (0) target = $region13
    $region12: #{feature_extractor_forward.1} parent=1 // pred_region
      _
    $region13: #{feature_extractor_forward.1} parent=1 // pred_fallthru
      _
    // Predicated region
    $region14: #{feature_extractor_forward.1} parent=1 // pred_check
      _
    $region15: #{feature_extractor_forward.1} parent=1 // pred_check_branch
      %19 = sbr.rel (0) target = $region17
    $region16: #{feature_extractor_forward.1} parent=1 // pred_region
      _
    $region17: #{feature_extractor_forward.1} parent=1 // pred_fallthru
      _
    // Predicated region
    $region18: #{feature_extractor_forward.1} parent=1 // pred_check
      _
    $region19: #{feature_extractor_forward.1} parent=1 // pred_check_branch
      %21 = sbr.rel (0) target = $region21
    $region20: #{feature_extractor_forward.1} parent=1 // pred_region
      _
    $region21: #{feature_extractor_forward.1} parent=1 // pred_fallthru
      _
    // Predicated region
    $region22: #{feature_extractor_forward.1} parent=1 // pred_check
      _
    $region23: #{feature_extractor_forward.1} parent=1 // pred_check_branch
      %23 = sbr.rel (0) target = $region25
    $region24: #{feature_extractor_forward.1} parent=1 // pred_region
      _
    $region25: #{feature_extractor_forward.1} parent=1 // pred_fallthru
      _
    %v25 = vld [vmem:[%s0] sm:$0xff]
    %v26 = vld [vmem:[%s0 + $0x8] sm:$0xff]
    %v27 = vld [vmem:[%s0 + $0x10] sm:$0xff]
    %v28 = vld [vmem:[%s0 + $0x18] sm:$0xff]
    %v29 = vld [vmem:[%s0 + $0x20] sm:$0x33]
    %v30 = vld [vmem:[%s0 + $0x28] sm:$0xff]
    %v31 = vld [vmem:[%s0 + $0x30] sm:$0xff]
    %v32 = vld [vmem:[%s0 + $0x38] sm:$0xff]
    %v33 = vld [vmem:[%s0 + $0x40] sm:$0xff]
    %v34 = vld [vmem:[%s0 + $0x48] sm:$0x33]
    %v35 = vld [vmem:[%s1] sm:$0xf]
    %v36 = vld [vmem:[%s1 + $0x4] sm:$0xf]
    %v37 = vld [vmem:[%s1 + $0x8] sm:$0xf]
    %v38 = vld [vmem:[%s1 + $0xc] sm:$0xf]
    %v43 = vunpack.c.l.b16 %v35
    %v44 = vunpack.c.l.b16 %v36
    %v45 = vunpack.c.l.b16 %v37
    %v46 = vunpack.c.l.b16 %v38
    %v47 = vpack.c.b16 %v44, %v43
    %v48 = vpack.c.b16 %v46, %v45
    %v54 = vunpack.c.l.b16 %v25
    %v55 = vunpack.c.h.b16 %v25
    %v56 = vunpack.c.l.b16 %v26
    %v57 = vunpack.c.h.b16 %v26
    %v58 = vunpack.c.l.b16 %v27
    %v59 = vunpack.c.h.b16 %v27
    %v60 = vunpack.c.l.b16 %v28
    %v61 = vunpack.c.h.b16 %v28
    %v62 = vunpack.c.l.b16 %v29
    %v63 = vunpack.c.h.b16 %v29
    %v64 = vpack.c.b16 %v56, %v54
    %v65 = vpack.c.b16 %v57, %v55
    %v66 = vpack.c.b16 %v60, %v58
    %v67 = vpack.c.b16 %v61, %v59
    %v68 = vpack.c.b16 %v62, %v62
    %v69 = vpack.c.b16 %v63, %v63
    %vm74 = vcmask 293888
    %v76 = vsel %vm74, %v47, 0
    %v79 = vsel %vm74, %v48, 0
    %vm81 = vcmask 1041408
    %v83 = vsel %vm81, %v68, 0
    %v86 = vsel %vm81, %v69, 0
    %88 = vmatprep.subr.bf16.mxu0 %v65
    %89 = vmatpush1.bf16.msra.mxu0 %v64
    %90 = vmatprep.subr.bf16.mxu0 %v67
    %91 = vmatpush1.bf16.msra.mxu0 %v66
    %92 = vmatprep.subr.bf16.mxu0 %v86
    %93 = vmatpush1.bf16.msra.mxu0 %v83
    %94 = vmatprep.subr.bf16.mxu0 0
    %95 = vmatpush1.bf16.msra.mxu0 0
    %96 = vmatprep.subr.bf16.mxu0 0
    %97 = vmatpush1.bf16.msra.mxu0 0
    %98 = vmatprep.subr.bf16.mxu0 0
    %99 = vmatpush1.bf16.msra.mxu0 0
    %100 = vmatprep.subr.bf16.mxu0 0
    %101 = vmatpush1.bf16.msra.mxu0 0
    %102 = vmatprep.subr.bf16.mxu0 0
    %103 = vmatpush1.bf16.msra.mxu0 0
    %104 = vmatprep.subr.bf16.mxu0 0
    %105 = vmatpush1.bf16.msra.mxu0 0
    %106 = vmatprep.subr.bf16.mxu0 0
    %107 = vmatpush1.bf16.msra.mxu0 0
    %108 = vmatprep.subr.bf16.mxu0 0
    %109 = vmatpush1.bf16.msra.mxu0 0
    %110 = vmatprep.subr.bf16.mxu0 0
    %111 = vmatpush1.bf16.msra.mxu0 0
    %112 = vmatprep.subr.bf16.mxu0 0
    %113 = vmatpush1.bf16.msra.mxu0 0
    %114 = vmatprep.subr.bf16.mxu0 0
    %115 = vmatpush1.bf16.msra.mxu0 0
    %116 = vmatprep.subr.bf16.mxu0 0
    %117 = vmatpush1.bf16.msra.mxu0 0
    %118 = vmatprep.subr.bf16.mxu0 0
    %119 = vmatpush1.bf16.msra.mxu0 0
    %120 = vmatprep.mubr.bf16.mxu0 0
    %121 = vmatmul.mubr.bf16.gmra.mrb[0].mxu0 %v76
    %v122 = vpop.f32.mrb[0].mxu0
    %v123 = vadd.f32 0.0, %v122
    %v124 = vpop.f32.mrb[0].mxu0
    %v125 = vadd.f32 0.0, %v124
    %v126 = vpop.f32.mrb[0].mxu0
    %v127 = vadd.f32 0.0, %v126
    %v128 = vpop.f32.mrb[0].mxu0
    %v129 = vadd.f32 0.0, %v128
    %130 = vmatprep.mubr.bf16.mxu0 0
    %131 = vmatmul.mubr.bf16.gmra.mrb[0].mxu0 %v79
    %v132 = vpop.f32.mrb[0].mxu0
    %v133 = vadd.f32 0.0, %v132
    %v134 = vpop.f32.mrb[0].mxu0
    %v135 = vadd.f32 0.0, %v134
    %v136 = vpop.f32.mrb[0].mxu0
    %v137 = vadd.f32 0.0, %v136
    %v138 = vpop.f32.mrb[0].mxu0
    %v139 = vadd.f32 0.0, %v138
    %140 = vdwg.mxu0
    %v146 = vunpack.c.l.b16 %v30
    %v147 = vunpack.c.h.b16 %v30
    %v148 = vunpack.c.l.b16 %v31
    %v149 = vunpack.c.h.b16 %v31
    %v150 = vunpack.c.l.b16 %v32
    %v151 = vunpack.c.h.b16 %v32
    %v152 = vunpack.c.l.b16 %v33
    %v153 = vunpack.c.h.b16 %v33
    %v154 = vunpack.c.l.b16 %v34
    %v155 = vunpack.c.h.b16 %v34
    %v156 = vpack.c.b16 %v148, %v146
    %v157 = vpack.c.b16 %v149, %v147
    %v158 = vpack.c.b16 %v152, %v150
    %v159 = vpack.c.b16 %v153, %v151
    %v160 = vpack.c.b16 %v154, %v154
    %v161 = vpack.c.b16 %v155, %v155
    %v167 = vsel %vm81, %v160, 0
    %v170 = vsel %vm81, %v161, 0
    %172 = vmatprep.subr.bf16.mxu0 %v157
    %173 = vmatpush1.bf16.msra.mxu0 %v156
    %174 = vmatprep.subr.bf16.mxu0 %v159
    %175 = vmatpush1.bf16.msra.mxu0 %v158
    %176 = vmatprep.subr.bf16.mxu0 %v170
    %177 = vmatpush1.bf16.msra.mxu0 %v167
    %178 = vmatprep.subr.bf16.mxu0 0
    %179 = vmatpush1.bf16.msra.mxu0 0
    %180 = vmatprep.subr.bf16.mxu0 0
    %181 = vmatpush1.bf16.msra.mxu0 0
    %182 = vmatprep.subr.bf16.mxu0 0
    %183 = vmatpush1.bf16.msra.mxu0 0
    %184 = vmatprep.subr.bf16.mxu0 0
    %185 = vmatpush1.bf16.msra.mxu0 0
    %186 = vmatprep.subr.bf16.mxu0 0
    %187 = vmatpush1.bf16.msra.mxu0 0
    %188 = vmatprep.subr.bf16.mxu0 0
    %189 = vmatpush1.bf16.msra.mxu0 0
    %190 = vmatprep.subr.bf16.mxu0 0
    %191 = vmatpush1.bf16.msra.mxu0 0
    %192 = vmatprep.subr.bf16.mxu0 0
    %193 = vmatpush1.bf16.msra.mxu0 0
    %194 = vmatprep.subr.bf16.mxu0 0
    %195 = vmatpush1.bf16.msra.mxu0 0
    %196 = vmatprep.subr.bf16.mxu0 0
    %197 = vmatpush1.bf16.msra.mxu0 0
    %198 = vmatprep.subr.bf16.mxu0 0
    %199 = vmatpush1.bf16.msra.mxu0 0
    %200 = vmatprep.subr.bf16.mxu0 0
    %201 = vmatpush1.bf16.msra.mxu0 0
    %202 = vmatprep.subr.bf16.mxu0 0
    %203 = vmatpush1.bf16.msra.mxu0 0
    %204 = vmatprep.mubr.bf16.mxu0 0
    %205 = vmatmul.mubr.bf16.gmra.mrb[0].mxu0 %v76
    %v206 = vpop.f32.mrb[0].mxu0
    %v207 = vadd.f32 0.0, %v206
    %v208 = vpop.f32.mrb[0].mxu0
    %v209 = vadd.f32 0.0, %v208
    %v210 = vpop.f32.mrb[0].mxu0
    %v211 = vadd.f32 0.0, %v210
    %v212 = vpop.f32.mrb[0].mxu0
    %v213 = vadd.f32 0.0, %v212
    %214 = vmatprep.mubr.bf16.mxu0 0
    %215 = vmatmul.mubr.bf16.gmra.mrb[0].mxu0 %v79
    %v216 = vpop.f32.mrb[0].mxu0
    %v217 = vadd.f32 0.0, %v216
    %v218 = vpop.f32.mrb[0].mxu0
    %v219 = vadd.f32 0.0, %v218
    %v220 = vpop.f32.mrb[0].mxu0
    %v221 = vadd.f32 0.0, %v220
    %v222 = vpop.f32.mrb[0].mxu0
    %v223 = vadd.f32 0.0, %v222
    %224 = vdwg.mxu0
    %v225 = vadd.f32 %v123, %v125
    %226 = vadd.xlane.f32.xlu0 %v225
    %v227 = vpop.xlane.xlu0 %226
    %v228 = vadd.f32 %v127, %v129
    %229 = vadd.xlane.f32.xlu0 %v228
    %v230 = vpop.xlane.xlu0 %229
    %v231 = vadd.f32 %v133, %v135
    %232 = vadd.xlane.f32.xlu0 %v231
    %v233 = vpop.xlane.xlu0 %232
    %v234 = vadd.f32 %v137, %v139
    %235 = vadd.xlane.f32.xlu0 %v234
    %v236 = vpop.xlane.xlu0 %235
    %v237 = vadd.f32 %v207, %v209
    %238 = vadd.xlane.f32.xlu0 %v237
    %v239 = vpop.xlane.xlu0 %238
    %v240 = vadd.f32 %v211, %v213
    %241 = vadd.xlane.f32.xlu0 %v240
    %v242 = vpop.xlane.xlu0 %241
    %v243 = vadd.f32 %v217, %v219
    %244 = vadd.xlane.f32.xlu0 %v243
    %v245 = vpop.xlane.xlu0 %244
    %v246 = vadd.f32 %v221, %v223
    %247 = vadd.xlane.f32.xlu0 %v246
    %v248 = vpop.xlane.xlu0 %247
    %v249 = vrcp.pop 256.0
    %v250 = vmul.f32 %v227, %v249
    %v251 = vmul.f32 %v230, %v249
    %v252 = vmul.f32 %v233, %v249
    %v253 = vmul.f32 %v236, %v249
    %v254 = vmul.f32 %v239, %v249
    %v255 = vmul.f32 %v242, %v249
    %v256 = vmul.f32 %v245, %v249
    %v257 = vmul.f32 %v248, %v249
    %v258 = vmul.f32 %v123, %v123
    %v259 = vmul.f32 %v125, %v125
    %v260 = vmul.f32 %v127, %v127
    %v261 = vmul.f32 %v129, %v129
    %v262 = vmul.f32 %v133, %v133
    %v263 = vmul.f32 %v135, %v135
    %v264 = vmul.f32 %v137, %v137
    %v265 = vmul.f32 %v139, %v139
    %v266 = vmul.f32 %v207, %v207
    %v267 = vmul.f32 %v209, %v209
    %v268 = vmul.f32 %v211, %v211
    %v269 = vmul.f32 %v213, %v213
    %v270 = vmul.f32 %v217, %v217
    %v271 = vmul.f32 %v219, %v219
    %v272 = vmul.f32 %v221, %v221
    %v273 = vmul.f32 %v223, %v223
    %v274 = vadd.f32 %v258, %v259
    %275 = vadd.xlane.f32.xlu0 %v274
    %v276 = vpop.xlane.xlu0 %275
    %v277 = vadd.f32 %v260, %v261
    %278 = vadd.xlane.f32.xlu0 %v277
    %v279 = vpop.xlane.xlu0 %278
    %v280 = vadd.f32 %v262, %v263
    %281 = vadd.xlane.f32.xlu0 %v280
    %v282 = vpop.xlane.xlu0 %281
    %v283 = vadd.f32 %v264, %v265
    %284 = vadd.xlane.f32.xlu0 %v283
    %v285 = vpop.xlane.xlu0 %284
    %v286 = vadd.f32 %v266, %v267
    %287 = vadd.xlane.f32.xlu0 %v286
    %v288 = vpop.xlane.xlu0 %287
    %v289 = vadd.f32 %v268, %v269
    %290 = vadd.xlane.f32.xlu0 %v289
    %v291 = vpop.xlane.xlu0 %290
    %v292 = vadd.f32 %v270, %v271
    %293 = vadd.xlane.f32.xlu0 %v292
    %v294 = vpop.xlane.xlu0 %293
    %v295 = vadd.f32 %v272, %v273
    %296 = vadd.xlane.f32.xlu0 %v295
    %v297 = vpop.xlane.xlu0 %296
    %v298 = vmul.f32 %v276, %v249
    %v299 = vmul.f32 %v279, %v249
    %v300 = vmul.f32 %v282, %v249
    %v301 = vmul.f32 %v285, %v249
    %v302 = vmul.f32 %v288, %v249
    %v303 = vmul.f32 %v291, %v249
    %v304 = vmul.f32 %v294, %v249
    %v305 = vmul.f32 %v297, %v249
    %v306 = vmul.f32 %v250, %v250
    %v307 = vmul.f32 %v251, %v251
    %v308 = vmul.f32 %v252, %v252
    %v309 = vmul.f32 %v253, %v253
    %v310 = vmul.f32 %v254, %v254
    %v311 = vmul.f32 %v255, %v255
    %v312 = vmul.f32 %v256, %v256
    %v313 = vmul.f32 %v257, %v257
    %v314 = vsub.f32 %v298, %v306
    %v315 = vsub.f32 %v299, %v307
    %v316 = vsub.f32 %v300, %v308
    %v317 = vsub.f32 %v301, %v309
    %v318 = vsub.f32 %v302, %v310
    %v319 = vsub.f32 %v303, %v311
    %v320 = vsub.f32 %v304, %v312
    %v321 = vsub.f32 %v305, %v313
    %v322 = vld [vmem:[%s2] sm:$0xff]
    %v323 = vld [vmem:[%s2 + $0x8] sm:$0xff]
    %v324 = vld [vmem:[%s2 + $0x10] sm:$0xff]
    %v325 = vld [vmem:[%s2 + $0x18] sm:$0xff]
    %v326 = vadd.f32 %v314, 1e-05
    %v327 = vadd.f32 %v315, 1e-05
    %v328 = vadd.f32 %v316, 1e-05
    %v329 = vadd.f32 %v317, 1e-05
    %v330 = vadd.f32 %v318, 1e-05
    %v331 = vadd.f32 %v319, 1e-05
    %v332 = vadd.f32 %v320, 1e-05
    %v333 = vadd.f32 %v321, 1e-05
    %v334 = vrsqrt.pop %v326
    %v335 = vrsqrt.pop %v327
    %v336 = vrsqrt.pop %v328
    %v337 = vrsqrt.pop %v329
    %v338 = vrsqrt.pop %v330
    %v339 = vrsqrt.pop %v331
    %v340 = vrsqrt.pop %v332
    %v341 = vrsqrt.pop %v333
    %v342 = vmul.f32 %v322, %v334
    %v343 = vmul.f32 %v323, %v335
    %v344 = vmul.f32 %v324, %v336
    %v345 = vmul.f32 %v325, %v337
    %v346 = vmul.f32 %v322, %v338
    %v347 = vmul.f32 %v323, %v339
    %v348 = vmul.f32 %v324, %v340
    %v349 = vmul.f32 %v325, %v341
    %v350 = vld [vmem:[%s3] sm:$0xff]
    %v351 = vld [vmem:[%s3 + $0x8] sm:$0xff]
    %v352 = vld [vmem:[%s3 + $0x10] sm:$0xff]
    %v353 = vld [vmem:[%s3 + $0x18] sm:$0xff]
    %v354 = vmul.f32 %v250, %v342
    %v355 = vmul.f32 %v251, %v343
    %v356 = vmul.f32 %v252, %v344
    %v357 = vmul.f32 %v253, %v345
    %v358 = vmul.f32 %v254, %v346
    %v359 = vmul.f32 %v255, %v347
    %v360 = vmul.f32 %v256, %v348
    %v361 = vmul.f32 %v257, %v349
    %v362 = vsub.f32 %v350, %v354
    %v363 = vsub.f32 %v351, %v355
    %v364 = vsub.f32 %v352, %v356
    %v365 = vsub.f32 %v353, %v357
    %v366 = vsub.f32 %v350, %v358
    %v367 = vsub.f32 %v351, %v359
    %v368 = vsub.f32 %v352, %v360
    %v369 = vsub.f32 %v353, %v361
    %371 = vset.pattern.permute.xlu0 0
    %372 = vperm.xlu0 %371, %v342
    %v373 = vpop.permute.xlu0 %372
    %376 = vset.pattern.permute.xlu0 0
    %377 = vperm.xlu0 %376, %v343
    %v378 = vpop.permute.xlu0 %377
    %381 = vset.pattern.permute.xlu0 0
    %382 = vperm.xlu0 %381, %v344
    %v383 = vpop.permute.xlu0 %382
    %386 = vset.pattern.permute.xlu0 0
    %387 = vperm.xlu0 %386, %v345
    %v388 = vpop.permute.xlu0 %387
    %391 = vset.pattern.permute.xlu0 0
    %392 = vperm.xlu0 %391, %v346
    %v393 = vpop.permute.xlu0 %392
    %396 = vset.pattern.permute.xlu0 0
    %397 = vperm.xlu0 %396, %v347
    %v398 = vpop.permute.xlu0 %397
    %401 = vset.pattern.permute.xlu0 0
    %402 = vperm.xlu0 %401, %v348
    %v403 = vpop.permute.xlu0 %402
    %406 = vset.pattern.permute.xlu0 0
    %407 = vperm.xlu0 %406, %v349
    %v408 = vpop.permute.xlu0 %407
    %v410 = vmul.f32 %v123, %v373
    %v411 = vmul.f32 %v125, %v373
    %v412 = vmul.f32 %v127, %v378
    %v413 = vmul.f32 %v129, %v378
    %v414 = vmul.f32 %v133, %v383
    %v415 = vmul.f32 %v135, %v383
    %v416 = vmul.f32 %v137, %v388
    %v417 = vmul.f32 %v139, %v388
    %v418 = vmul.f32 %v207, %v393
    %v419 = vmul.f32 %v209, %v393
    %v420 = vmul.f32 %v211, %v398
    %v421 = vmul.f32 %v213, %v398
    %v422 = vmul.f32 %v217, %v403
    %v423 = vmul.f32 %v219, %v403
    %v424 = vmul.f32 %v221, %v408
    %v425 = vmul.f32 %v223, %v408
    %427 = vset.pattern.permute.xlu0 0
    %428 = vperm.xlu0 %427, %v362
    %v429 = vpop.permute.xlu0 %428
    %432 = vset.pattern.permute.xlu0 0
    %433 = vperm.xlu0 %432, %v363
    %v434 = vpop.permute.xlu0 %433
    %437 = vset.pattern.permute.xlu0 0
    %438 = vperm.xlu0 %437, %v364
    %v439 = vpop.permute.xlu0 %438
    %442 = vset.pattern.permute.xlu0 0
    %443 = vperm.xlu0 %442, %v365
    %v444 = vpop.permute.xlu0 %443
    %447 = vset.pattern.permute.xlu0 0
    %448 = vperm.xlu0 %447, %v366
    %v449 = vpop.permute.xlu0 %448
    %452 = vset.pattern.permute.xlu0 0
    %453 = vperm.xlu0 %452, %v367
    %v454 = vpop.permute.xlu0 %453
    %457 = vset.pattern.permute.xlu0 0
    %458 = vperm.xlu0 %457, %v368
    %v459 = vpop.permute.xlu0 %458
    %462 = vset.pattern.permute.xlu0 0
    %463 = vperm.xlu0 %462, %v369
    %v464 = vpop.permute.xlu0 %463
    %v466 = vadd.f32 %v410, %v429
    %v467 = vadd.f32 %v411, %v429
    %v468 = vadd.f32 %v412, %v434
    %v469 = vadd.f32 %v413, %v434
    %v470 = vadd.f32 %v414, %v439
    %v471 = vadd.f32 %v415, %v439
    %v472 = vadd.f32 %v416, %v444
    %v473 = vadd.f32 %v417, %v444
    %v474 = vadd.f32 %v418, %v449
    %v475 = vadd.f32 %v419, %v449
    %v476 = vadd.f32 %v420, %v454
    %v477 = vadd.f32 %v421, %v454
    %v478 = vadd.f32 %v422, %v459
    %v479 = vadd.f32 %v423, %v459
    %v480 = vadd.f32 %v424, %v464
    %v481 = vadd.f32 %v425, %v464
    %v482 = vmax.f32 %v466, 0.0
    %v483 = vmax.f32 %v467, 0.0
    %v484 = vmax.f32 %v468, 0.0
    %v485 = vmax.f32 %v469, 0.0
    %v486 = vmax.f32 %v470, 0.0
    %v487 = vmax.f32 %v471, 0.0
    %v488 = vmax.f32 %v472, 0.0
    %v489 = vmax.f32 %v473, 0.0
    %v490 = vmax.f32 %v474, 0.0
    %v491 = vmax.f32 %v475, 0.0
    %v492 = vmax.f32 %v476, 0.0
    %v493 = vmax.f32 %v477, 0.0
    %v494 = vmax.f32 %v478, 0.0
    %v495 = vmax.f32 %v479, 0.0
    %v496 = vmax.f32 %v480, 0.0
    %v497 = vmax.f32 %v481, 0.0
    %v498 = vadd.f32 %v482, %v483
    %499 = vadd.xlane.f32.xlu0 %v498
    %v500 = vpop.xlane.xlu0 %499
    %v501 = vadd.f32 %v484, %v485
    %502 = vadd.xlane.f32.xlu0 %v501
    %v503 = vpop.xlane.xlu0 %502
    %v504 = vadd.f32 %v486, %v487
    %505 = vadd.xlane.f32.xlu0 %v504
    %v506 = vpop.xlane.xlu0 %505
    %v507 = vadd.f32 %v488, %v489
    %508 = vadd.xlane.f32.xlu0 %v507
    %v509 = vpop.xlane.xlu0 %508
    %v510 = vadd.f32 %v490, %v491
    %511 = vadd.xlane.f32.xlu0 %v510
    %v512 = vpop.xlane.xlu0 %511
    %v513 = vadd.f32 %v492, %v493
    %514 = vadd.xlane.f32.xlu0 %v513
    %v515 = vpop.xlane.xlu0 %514
    %v516 = vadd.f32 %v494, %v495
    %517 = vadd.xlane.f32.xlu0 %v516
    %v518 = vpop.xlane.xlu0 %517
    %v519 = vadd.f32 %v496, %v497
    %520 = vadd.xlane.f32.xlu0 %v519
    %v521 = vpop.xlane.xlu0 %520
    %v522 = vmul.f32 %v500, %v249
    %v523 = vmul.f32 %v503, %v249
    %v524 = vmul.f32 %v506, %v249
    %v525 = vmul.f32 %v509, %v249
    %v526 = vmul.f32 %v512, %v249
    %v527 = vmul.f32 %v515, %v249
    %v528 = vmul.f32 %v518, %v249
    %v529 = vmul.f32 %v521, %v249
    %v530 = vpack.c.bf16 %v523, %v522
    %v531 = vpack.c.bf16 %v525, %v524
    %v532 = vpack.c.bf16 %v527, %v526
    %v533 = vpack.c.bf16 %v529, %v528
    %v534 = vld [vmem:[%s4] sm:$0xf]
    %v535 = vld [vmem:[%s4 + $0x4] sm:$0xf]
    %v536 = vld [vmem:[%s4 + $0x8] sm:$0xf]
    %v537 = vld [vmem:[%s4 + $0xc] sm:$0xf]
    %v538 = vld [vmem:[%s5] sm:$0x1]
    %v540 = vlaneseq
    %v541 = vshrl.u32 %v540, 7
    %v542 = vsub.s32 0, %v541
    %v543 = vrot.slane %v538, %v542
    %v549 = vunpack.c.l.b16 %v530
    %v550 = vunpack.c.h.b16 %v530
    %v551 = vunpack.c.l.b16 %v531
    %v552 = vunpack.c.h.b16 %v531
    %v553 = vunpack.c.l.b16 %v532
    %v554 = vunpack.c.h.b16 %v532
    %v555 = vunpack.c.l.b16 %v533
    %v556 = vunpack.c.h.b16 %v533
    %v557 = vlaneseq
    %v558 = vand.u32 %v557, 127
    %v559 = vlaneseq
    %v560 = vshrl.u32 %v559, 7
    %v561 = vsub.s32 %v558, %v560
    %v562 = vrot.slane %v549, %v561
    %v563 = vadd.s32 %v558, 4294967288
    %v564 = vlaneseq
    %v565 = vshrl.u32 %v564, 7
    %v566 = vsub.s32 %v563, %v565
    %v567 = vrot.slane %v550, %v566
    %vm568 = vcmask 130112
    %v569 = vsel %vm568, %v567, %v562
    %v570 = vadd.s32 %v558, 4294967280
    %v571 = vlaneseq
    %v572 = vshrl.u32 %v571, 7
    %v573 = vsub.s32 %v570, %v572
    %v574 = vrot.slane %v551, %v573
    %vm575 = vcmask 195712
    %v576 = vsel %vm575, %v574, %v569
    %v577 = vadd.s32 %v558, 4294967272
    %v578 = vlaneseq
    %v579 = vshrl.u32 %v578, 7
    %v580 = vsub.s32 %v577, %v579
    %v581 = vrot.slane %v552, %v580
    %vm582 = vcmask 261312
    %v583 = vsel %vm582, %v581, %v576
    %v584 = vlaneseq
    %v585 = vshrl.u32 %v584, 7
    %v586 = vsub.s32 %v558, %v585
    %v587 = vrot.slane %v553, %v586
    %v588 = vlaneseq
    %v589 = vshrl.u32 %v588, 7
    %v590 = vsub.s32 %v563, %v589
    %v591 = vrot.slane %v554, %v590
    %v592 = vsel %vm568, %v591, %v587
    %v593 = vlaneseq
    %v594 = vshrl.u32 %v593, 7
    %v595 = vsub.s32 %v570, %v594
    %v596 = vrot.slane %v555, %v595
    %v597 = vsel %vm575, %v596, %v592
    %v598 = vlaneseq
    %v599 = vshrl.u32 %v598, 7
    %v600 = vsub.s32 %v577, %v599
    %v601 = vrot.slane %v556, %v600
    %v602 = vsel %vm582, %v601, %v597
    %vm603 = vcmask 1041409
    %v604 = vsel %vm603, %v602, %v583
    %v605 = vpack.c.b16 %v604, %v604
    %v610 = vunpack.c.l.b16 %v534
    %v611 = vunpack.c.l.b16 %v535
    %v612 = vunpack.c.l.b16 %v536
    %v613 = vunpack.c.l.b16 %v537
    %v614 = vpack.c.b16 %v611, %v610
    %v615 = vpack.c.b16 %v613, %v612
    %vm618 = vcmask 261120
    %v620 = vsel %vm618, %v605, 0
    %622 = vmatprep.subr.bf16.mxu0 0
    %623 = vmatpush1.bf16.msra.mxu0 %v614
    %624 = vmatprep.subr.bf16.mxu0 0
    %625 = vmatpush1.bf16.msra.mxu0 %v615
    %626 = vmatprep.subr.bf16.mxu0 0
    %627 = vmatpush1.bf16.msra.mxu0 0
    %628 = vmatprep.subr.bf16.mxu0 0
    %629 = vmatpush1.bf16.msra.mxu0 0
    %630 = vmatprep.subr.bf16.mxu0 0
    %631 = vmatpush1.bf16.msra.mxu0 0
    %632 = vmatprep.subr.bf16.mxu0 0
    %633 = vmatpush1.bf16.msra.mxu0 0
    %634 = vmatprep.subr.bf16.mxu0 0
    %635 = vmatpush1.bf16.msra.mxu0 0
    %636 = vmatprep.subr.bf16.mxu0 0
    %637 = vmatpush1.bf16.msra.mxu0 0
    %638 = vmatprep.subr.bf16.mxu0 0
    %639 = vmatpush1.bf16.msra.mxu0 0
    %640 = vmatprep.subr.bf16.mxu0 0
    %641 = vmatpush1.bf16.msra.mxu0 0
    %642 = vmatprep.subr.bf16.mxu0 0
    %643 = vmatpush1.bf16.msra.mxu0 0
    %644 = vmatprep.subr.bf16.mxu0 0
    %645 = vmatpush1.bf16.msra.mxu0 0
    %646 = vmatprep.subr.bf16.mxu0 0
    %647 = vmatpush1.bf16.msra.mxu0 0
    %648 = vmatprep.subr.bf16.mxu0 0
    %649 = vmatpush1.bf16.msra.mxu0 0
    %650 = vmatprep.subr.bf16.mxu0 0
    %651 = vmatpush1.bf16.msra.mxu0 0
    %652 = vmatprep.subr.bf16.mxu0 0
    %653 = vmatpush1.bf16.msra.mxu0 0
    %654 = vmatprep.mubr.bf16.mxu0 0
    %655 = vmatmul.mubr.bf16.gmra.mrb[0].mxu0 %v620
    %v656 = vpop.f32.mrb[0].mxu0
    %v657 = vadd.f32 %v543, %v656
    %v658 = vpop.f32.mrb[0].mxu0
    %v659 = vpop.f32.mrb[0].mxu0
    %v660 = vpop.f32.mrb[0].mxu0
    %661 = vdwg.mxu0
    %vm662 = vcmask 58368
    %663 = vst.msk [vmem:[#allocation2] sm:$0x3] %vm662, %v657
    // Predicated region
    $region26: #{feature_extractor_forward.1} parent=1 // pred_check
      _
    $region27: #{feature_extractor_forward.1} parent=1 // pred_check_branch
      %665 = sbr.rel (0) target = $region29
    $region28: #{feature_extractor_forward.1} parent=1 // pred_region
      %s667 = ssub.s32 32, 32
      %668 = vsyncadd [#allocation3], %s667
      %s670 = sshll.u32 [#allocation2], 4
      %s671 = int_to_ptr.vmem [resolvable:$true] %s670
      %673 = dma.vmem_to_hbm [thread:$0]  %s671, 32, %s6, [#allocation3]
    $region29: #{feature_extractor_forward.1} parent=1 // pred_fallthru
      _
    // Predicated region
    $region30: #{feature_extractor_forward.1} parent=1 // pred_check
      _
    $region31: #{feature_extractor_forward.1} parent=1 // pred_check_branch
      %675 = sbr.rel (0) target = $region33
    $region32: #{feature_extractor_forward.1} parent=1 // pred_region
      %676 = dma.done [#allocation3], 32
    $region33: #{feature_extractor_forward.1} parent=1 // pred_fallthru
      _
    %677 = vsyncpa [#allocation3], 1

</llo_original>
